<compile_context>
chip_gen: v6e
topology: v6e:2x2x1
jax: 0.10.0
libtpu: 0.0.40
codegen_flags: <defaults>
</compile_context>

<pallas_src>
import functools

import jax
import jax.numpy as jnp
from jax.experimental import pallas as pl
from jax.experimental.pallas import tpu as pltpu


def _round_up(x: int, m: int) -> int:
    return (x + m - 1) // m * m


# Quantized tile sizes (all multiples of 16 so bf16 inputs stay sublane-aligned).
_TILE_CHOICES = (512, 256, 128, 64, 32, 16, 8)


def _vmem_capacity_bytes() -> int:
    """Per-TensorCore VMEM capacity; conservative v7x fallback if query fails."""
    try:
        info = pltpu.get_tpu_info()
        cap = int(getattr(info, "vmem_capacity_bytes", 0))
        if cap > 0:
            return cap
    except Exception:  # pragma: no cover - defensive, e.g. unusual backends
        pass
    return 64 * 1024 * 1024


def sae_kernel(x_ref,
               w1_ref, b1_ref,
               w2_ref, b2_ref,
               w3_ref, b3_ref,
               w4_ref, b4_ref,
               o_ref):
    """Whole 4-layer MLP for one batch tile (hidden dims are tiny, lane-padded)."""
    cdt = w1_ref.dtype                       # MXU operand dtype (bf16 or f32)
    x = x_ref[...].astype(cdt)                                          # (bt, M)
    h = jax.nn.sigmoid(
        jnp.dot(x, w1_ref[...], preferred_element_type=jnp.float32) + b1_ref[...])
    h = jax.nn.sigmoid(
        jnp.dot(h.astype(cdt), w2_ref[...],
                preferred_element_type=jnp.float32) + b2_ref[...])
    h = jax.nn.sigmoid(
        jnp.dot(h.astype(cdt), w3_ref[...],
                preferred_element_type=jnp.float32) + b3_ref[...])
    out = jnp.dot(h.astype(cdt), w4_ref[...],
                  preferred_element_type=jnp.float32) + b4_ref[...]
    o_ref[...] = out.astype(o_ref.dtype)                                # (bt, M)


def _pick_batch_tile(batch: int, n_movies: int, x_itemsize: int, out_itemsize: int,
                     weight_bytes: int, vmem_cap: int, max_tile: int) -> int:
    """Largest quantized batch tile that fits the generation-aware VMEM budget."""
    headroom = 8 << 20                       # Mosaic internal scratch + small temps
    avail = max(int(0.8 * (vmem_cap - weight_bytes - headroom)), 2 << 20)
    # Double-buffered x tile + double-buffered out tile + one f32 temp for the
    # fc4 result block.
    per_row = 2 * n_movies * (x_itemsize + out_itemsize) + 4 * n_movies
    vmem_bt = max(8, avail // per_row)
    # Aim for >= 2 grid steps so the "parallel" batch axis shards across both
    # TensorCores on v7x (one extra ~0.35us step elsewhere is noise).
    if batch > 16:
        want = _round_up(-(-batch // 2), 8)          # ceil(batch/2), multiple of 8
    else:
        want = _round_up(max(batch, 1), 8)
    bt = min(vmem_bt, want, max_tile)
    for c in _TILE_CHOICES:
        if c <= bt:
            return c
    return 8


@functools.partial(jax.jit, static_argnames=("batch_tile", "vmem_limit"))
def _sae_pallas(x, w1, b1, w2, b2, w3, b3, w4, b4, *, batch_tile, vmem_limit):
    B, M = x.shape
    bt = batch_tile
    grid = (pl.cdiv(B, bt),)     # ragged last block is masked by Pallas (no pad/slice)

    def weight_spec(a):
        # Constant block index -> fetched once; Buffered(1) -> no wasted 2nd buffer.
        return pl.BlockSpec(a.shape, lambda i: (0, 0), pipeline_mode=pl.Buffered(1))

    weights = (w1, b1, w2, b2, w3, b3, w4, b4)
    w_bytes = sum(int(a.size) * a.dtype.itemsize for a in weights)
    h1, h2, h3 = w1.shape[1], w2.shape[1], w3.shape[1]
    cost = pl.CostEstimate(
        flops=2 * B * (M * h1 + h1 * h2 + h2 * h3 + h3 * M),
        transcendentals=B * (h1 + h2 + h3),                  # sigmoids
        bytes_accessed=B * M * (x.dtype.itemsize + 4) + w_bytes,
    )

    return pl.pallas_call(
        sae_kernel,
        out_shape=jax.ShapeDtypeStruct((B, M), jnp.float32),
        grid_spec=pltpu.PrefetchScalarGridSpec(
            num_scalar_prefetch=0,
            grid=grid,
            in_specs=[
                pl.BlockSpec((bt, M), lambda i: (i, 0)),     # x tile (pipelined)
                weight_spec(w1), weight_spec(b1),
                weight_spec(w2), weight_spec(b2),
                weight_spec(w3), weight_spec(b3),
                weight_spec(w4), weight_spec(b4),
            ],
            out_specs=pl.BlockSpec((bt, M), lambda i: (i, 0)),
        ),
        compiler_params=pltpu.CompilerParams(
            dimension_semantics=("parallel",),               # megacore-shards on v7x
            vmem_limit_bytes=vmem_limit,
        ),
        cost_estimate=cost,
    )(x, w1, b1, w2, b2, w3, b3, w4, b4)


def sae_forward(x, params, *, max_batch_tile=512):
    """x: (B, M_padded) f32 or bf16.  params: lane-padded dict from pad_params_for_tpu."""
    B, M = x.shape
    weights = (params["w1"], params["b1"], params["w2"], params["b2"],
               params["w3"], params["b3"], params["w4"], params["b4"])
    assert params["w1"].shape[0] == M and params["w4"].shape[1] == M

    w_bytes = sum(int(a.size) * a.dtype.itemsize for a in weights)
    vmem_cap = _vmem_capacity_bytes()
    bt = _pick_batch_tile(B, M, x.dtype.itemsize, 4, w_bytes, vmem_cap, max_batch_tile)

    # Explicit scoped-VMEM request: single-buffered weights + double-buffered x/out
    # tiles + f32 temporaries, with margin; capped below physical capacity so
    # Mosaic keeps headroom for internal scratch on every generation.
    io_bytes = 2 * bt * M * (x.dtype.itemsize + 4)
    tmp_bytes = bt * M * 4 + 6 * bt * params["w1"].shape[1] * 4
    vmem_limit = int(1.15 * (w_bytes + io_bytes + tmp_bytes)) + (2 << 20)
    vmem_limit = max(16 << 20, min(vmem_limit, vmem_cap - (8 << 20), 100 << 20))

    return _sae_pallas(x, *weights, batch_tile=bt, vmem_limit=vmem_limit)


def pad_params_for_tpu(params, *, hidden_pad=128, movie_multiple=128,
                       weight_dtype=jnp.bfloat16):
    """Pad hidden dims (20/10/20 -> hidden_pad) and nb_movies up to a multiple of
    movie_multiple; cast weights to `weight_dtype` (biases stay f32).

    Exactness: padded hidden pre-activations are 0 -> sigmoid 0.5 on padded lanes,
    but every consumer weight's padded ROWS are exactly zero (also in bf16), so the
    padded lanes contribute nothing.  Padded movie columns of the output are exactly
    zero (zero w4 columns, zero b4) and are sliced off by the caller at data prep.
    """
    w1, b1 = params["w1"], params["b1"]
    w2, b2 = params["w2"], params["b2"]
    w3, b3 = params["w3"], params["b3"]
    w4, b4 = params["w4"], params["b4"]
    P = hidden_pad
    M = w1.shape[0]
    Mp = _round_up(M, movie_multiple)
    assert P >= max(w1.shape[1], w2.shape[1], w3.shape[1])

    def pad_to(a, rows, cols):
        return jnp.pad(a, ((0, rows - a.shape[0]), (0, cols - a.shape[1])))

    wdt = weight_dtype
    return {
        "w1": pad_to(w1, Mp, P).astype(wdt), "b1": pad_to(b1, 1, P),
        "w2": pad_to(w2, P, P).astype(wdt),  "b2": pad_to(b2, 1, P),
        "w3": pad_to(w3, P, P).astype(wdt),  "b3": pad_to(b3, 1, P),
        "w4": pad_to(w4, P, Mp).astype(wdt), "b4": pad_to(b4, 1, Mp),
    }


def pad_movies(x, movie_multiple=128):
    """Data-prep helper: zero-pad the movie axis of x to a multiple of 128 lanes."""
    M = x.shape[1]
    Mp = _round_up(M, movie_multiple)
    if Mp == M:
        return x
    return jnp.pad(x, ((0, 0), (0, Mp - M)))


def init_params(key, nb_movies):
    """Mimics PyTorch nn.Linear default init: U(-1/sqrt(fan_in), +1/sqrt(fan_in))."""
    dims = [(nb_movies, 20), (20, 10), (10, 20), (20, nb_movies)]
    params = {}
    keys = jax.random.split(key, 2 * len(dims))
    for idx, (fan_in, fan_out) in enumerate(dims):
        bound = 1.0 / jnp.sqrt(jnp.float32(fan_in))
        params[f"w{idx + 1}"] = jax.random.uniform(
            keys[2 * idx], (fan_in, fan_out), minval=-bound, maxval=bound,
            dtype=jnp.float32)
        params[f"b{idx + 1}"] = jax.random.uniform(
            keys[2 * idx + 1], (1, fan_out), minval=-bound, maxval=bound,
            dtype=jnp.float32)
    return params


def sae_reference(x, params):
    """Plain-JAX reference for the same forward pass (unpadded params)."""
    h = jax.nn.sigmoid(x @ params["w1"] + params["b1"])
    h = jax.nn.sigmoid(h @ params["w2"] + params["b2"])
    h = jax.nn.sigmoid(h @ params["w3"] + params["b3"])
    return h @ params["w4"] + params["b4"]


if __name__ == "__main__":
    key = jax.random.PRNGKey(0)
    k_param, k_x, k_mask = jax.random.split(key, 3)

    nb_movies = 250   # deliberately NOT a multiple of 128 (exercises movie padding)
    batch = 64        # small batch of users; ratings in [0, 5], many zeros (unrated)
    M_pad = _round_up(nb_movies, 128)

    params = init_params(k_param, nb_movies)

    ratings = jax.random.randint(k_x, (batch, nb_movies), 0, 6).astype(jnp.float32)
    mask = jax.random.bernoulli(k_mask, p=0.2, shape=(batch, nb_movies))
    x = jnp.where(mask, ratings, 0.0).astype(jnp.float32)
    ref = sae_reference(x, params)

    # ---- Fast path: bf16 weights, bf16 x (ratings 0..5 are bf16-exact), f32 out ----
    params_bf16 = pad_params_for_tpu(params, weight_dtype=jnp.bfloat16)
    x_bf16 = pad_movies(x).astype(jnp.bfloat16)        # data-prep, not in the hot path
    out = jax.block_until_ready(sae_forward(x_bf16, params_bf16))
    assert out.shape == (batch, M_pad) and out.dtype == jnp.float32
    # Reference with bf16-rounded weights isolates kernel error from quantization.
    params_q = {k: (v.astype(jnp.bfloat16).astype(jnp.float32) if k.startswith("w") else v)
                for k, v in params.items()}
    ref_q = sae_reference(x, params_q)
    assert jnp.allclose(out[:, :nb_movies], ref_q, atol=1e-2, rtol=1e-2), \
        "Pallas bf16 path mismatch vs bf16-weight reference"
    assert jnp.allclose(out[:, :nb_movies], ref, atol=5e-2, rtol=5e-2), \
        "Pallas bf16 path too far from f32 reference"
    assert float(jnp.max(jnp.abs(out[:, nb_movies:]))) == 0.0, \
        "padded movie columns must be exactly zero"

    # ---- f32 path, ragged batch (non-multiple of the tile): tight structural check ----
    params_f32 = pad_params_for_tpu(params, weight_dtype=jnp.float32)
    x_big = jnp.tile(x, (17, 1))[: 17 * batch - 5]              # 1083 rows
    x_big_pad = pad_movies(x_big)
    out_big = jax.block_until_ready(sae_forward(x_big_pad, params_f32))
    ref_big = sae_reference(x_big, params)
    assert out_big.shape == (x_big.shape[0], M_pad)
    assert jnp.allclose(out_big[:, :nb_movies], ref_big, atol=1e-4, rtol=1e-4), \
        "Pallas f32 path mismatch (ragged big batch)"

    print("KERNEL_OK")
</pallas_src>

<mosaic_0001>
module attributes {stable_mosaic.version = 11 : i64} {
  func.func @sae_kernel(%arg0: i32, %arg1: memref<32x256xbf16, #tpu.memory_space<vmem>>, %arg2: memref<256x128xbf16, #tpu.memory_space<vmem>>, %arg3: memref<1x128xf32, #tpu.memory_space<vmem>>, %arg4: memref<128x128xbf16, #tpu.memory_space<vmem>>, %arg5: memref<1x128xf32, #tpu.memory_space<vmem>>, %arg6: memref<128x128xbf16, #tpu.memory_space<vmem>>, %arg7: memref<1x128xf32, #tpu.memory_space<vmem>>, %arg8: memref<128x256xbf16, #tpu.memory_space<vmem>>, %arg9: memref<1x256xf32, #tpu.memory_space<vmem>>, %arg10: memref<32x256xf32, #tpu.memory_space<vmem>>) attributes {dimension_semantics = [#tpu.dimension_semantics<parallel>], iteration_bounds = array<i64: 2>, scalar_prefetch = 0 : i64, scratch_operands = 0 : i64, tpu.core_type = #tpu.core_type<tc>, window_params = [{transform_indices = @transform_0, window_bounds = array<i64: 32, 256>}, {pipeline_mode = #tpu.pipeline_mode<synchronous>, transform_indices = @transform_1, window_bounds = array<i64: 256, 128>}, {pipeline_mode = #tpu.pipeline_mode<synchronous>, transform_indices = @transform_2, window_bounds = array<i64: 1, 128>}, {pipeline_mode = #tpu.pipeline_mode<synchronous>, transform_indices = @transform_3, window_bounds = array<i64: 128, 128>}, {pipeline_mode = #tpu.pipeline_mode<synchronous>, transform_indices = @transform_4, window_bounds = array<i64: 1, 128>}, {pipeline_mode = #tpu.pipeline_mode<synchronous>, transform_indices = @transform_5, window_bounds = array<i64: 128, 128>}, {pipeline_mode = #tpu.pipeline_mode<synchronous>, transform_indices = @transform_6, window_bounds = array<i64: 1, 128>}, {pipeline_mode = #tpu.pipeline_mode<synchronous>, transform_indices = @transform_7, window_bounds = array<i64: 128, 256>}, {pipeline_mode = #tpu.pipeline_mode<synchronous>, transform_indices = @transform_8, window_bounds = array<i64: 1, 256>}, {transform_indices = @transform_9, window_bounds = array<i64: 32, 256>}]} {
    %c0 = arith.constant 0 : index
    %c0_0 = arith.constant 0 : index
    %0 = vector.load %arg1[%c0, %c0_0] : memref<32x256xbf16, #tpu.memory_space<vmem>>, vector<32x256xbf16>
    %c0_1 = arith.constant 0 : index
    %c0_2 = arith.constant 0 : index
    %1 = vector.load %arg2[%c0_1, %c0_2] : memref<256x128xbf16, #tpu.memory_space<vmem>>, vector<256x128xbf16>
    %cst = arith.constant dense<0.000000e+00> : vector<32x128xf32>
    %2 = tpu.matmul %0, %1, %cst {dimension_numbers = #tpu.dot_dimension_numbers<[1], [0], [0], [1], [0, 0, 1, 1], [], []>} : vector<32x256xbf16>, vector<256x128xbf16>, vector<32x128xf32> -> vector<32x128xf32>
    %c0_3 = arith.constant 0 : index
    %c0_4 = arith.constant 0 : index
    %3 = vector.load %arg3[%c0_3, %c0_4] : memref<1x128xf32, #tpu.memory_space<vmem>>, vector<1x128xf32>
    %4 = vector.broadcast %3 : vector<1x128xf32> to vector<32x128xf32>
    %5 = arith.addf %2, %4 : vector<32x128xf32>
    %6 = arith.negf %5 : vector<32x128xf32>
    %7 = math.exp %6 : vector<32x128xf32>
    %cst_5 = arith.constant 1.000000e+00 : f32
    %8 = vector.broadcast %cst_5 : f32 to vector<32x128xf32>
    %9 = arith.addf %8, %7 : vector<32x128xf32>
    %10 = arith.divf %8, %9 : vector<32x128xf32>
    %11 = arith.truncf %10 : vector<32x128xf32> to vector<32x128xbf16>
    %c0_6 = arith.constant 0 : index
    %c0_7 = arith.constant 0 : index
    %12 = vector.load %arg4[%c0_6, %c0_7] : memref<128x128xbf16, #tpu.memory_space<vmem>>, vector<128x128xbf16>
    %cst_8 = arith.constant dense<0.000000e+00> : vector<32x128xf32>
    %13 = tpu.matmul %11, %12, %cst_8 {dimension_numbers = #tpu.dot_dimension_numbers<[1], [0], [0], [1], [0, 0, 1, 1], [], []>} : vector<32x128xbf16>, vector<128x128xbf16>, vector<32x128xf32> -> vector<32x128xf32>
    %c0_9 = arith.constant 0 : index
    %c0_10 = arith.constant 0 : index
    %14 = vector.load %arg5[%c0_9, %c0_10] : memref<1x128xf32, #tpu.memory_space<vmem>>, vector<1x128xf32>
    %15 = vector.broadcast %14 : vector<1x128xf32> to vector<32x128xf32>
    %16 = arith.addf %13, %15 : vector<32x128xf32>
    %17 = arith.negf %16 : vector<32x128xf32>
    %18 = math.exp %17 : vector<32x128xf32>
    %cst_11 = arith.constant 1.000000e+00 : f32
    %19 = vector.broadcast %cst_11 : f32 to vector<32x128xf32>
    %20 = arith.addf %19, %18 : vector<32x128xf32>
    %21 = arith.divf %19, %20 : vector<32x128xf32>
    %22 = arith.truncf %21 : vector<32x128xf32> to vector<32x128xbf16>
    %c0_12 = arith.constant 0 : index
    %c0_13 = arith.constant 0 : index
    %23 = vector.load %arg6[%c0_12, %c0_13] : memref<128x128xbf16, #tpu.memory_space<vmem>>, vector<128x128xbf16>
    %cst_14 = arith.constant dense<0.000000e+00> : vector<32x128xf32>
    %24 = tpu.matmul %22, %23, %cst_14 {dimension_numbers = #tpu.dot_dimension_numbers<[1], [0], [0], [1], [0, 0, 1, 1], [], []>} : vector<32x128xbf16>, vector<128x128xbf16>, vector<32x128xf32> -> vector<32x128xf32>
    %c0_15 = arith.constant 0 : index
    %c0_16 = arith.constant 0 : index
    %25 = vector.load %arg7[%c0_15, %c0_16] : memref<1x128xf32, #tpu.memory_space<vmem>>, vector<1x128xf32>
    %26 = vector.broadcast %25 : vector<1x128xf32> to vector<32x128xf32>
    %27 = arith.addf %24, %26 : vector<32x128xf32>
    %28 = arith.negf %27 : vector<32x128xf32>
    %29 = math.exp %28 : vector<32x128xf32>
    %cst_17 = arith.constant 1.000000e+00 : f32
    %30 = vector.broadcast %cst_17 : f32 to vector<32x128xf32>
    %31 = arith.addf %30, %29 : vector<32x128xf32>
    %32 = arith.divf %30, %31 : vector<32x128xf32>
    %33 = arith.truncf %32 : vector<32x128xf32> to vector<32x128xbf16>
    %c0_18 = arith.constant 0 : index
    %c0_19 = arith.constant 0 : index
    %34 = vector.load %arg8[%c0_18, %c0_19] : memref<128x256xbf16, #tpu.memory_space<vmem>>, vector<128x256xbf16>
    %cst_20 = arith.constant dense<0.000000e+00> : vector<32x256xf32>
    %35 = tpu.matmul %33, %34, %cst_20 {dimension_numbers = #tpu.dot_dimension_numbers<[1], [0], [0], [1], [0, 0, 1, 1], [], []>} : vector<32x128xbf16>, vector<128x256xbf16>, vector<32x256xf32> -> vector<32x256xf32>
    %c0_21 = arith.constant 0 : index
    %c0_22 = arith.constant 0 : index
    %36 = vector.load %arg9[%c0_21, %c0_22] : memref<1x256xf32, #tpu.memory_space<vmem>>, vector<1x256xf32>
    %37 = vector.broadcast %36 : vector<1x256xf32> to vector<32x256xf32>
    %38 = arith.addf %35, %37 : vector<32x256xf32>
    %c0_23 = arith.constant 0 : index
    %c0_24 = arith.constant 0 : index
    %39 = vector.load %arg10[%c0_23, %c0_24] : memref<32x256xf32, #tpu.memory_space<vmem>>, vector<32x256xf32>
    tpu.vector_store %arg10[%c0_23, %c0_24], %38 {strides = array<i32>} : memref<32x256xf32, #tpu.memory_space<vmem>>, vector<32x256xf32>,
    return
  }
  func.func @transform_0(%arg0: i32) -> (i32, i32) {
    %c0_i32 = arith.constant 0 : i32
    %c0_i32_0 = arith.constant 0 : i32
    return %arg0, %c0_i32 : i32, i32
  }
  func.func @transform_1(%arg0: i32) -> (i32, i32) {
    %c0_i32 = arith.constant 0 : i32
    %c0_i32_0 = arith.constant 0 : i32
    %c0_i32_1 = arith.constant 0 : i32
    return %c0_i32, %c0_i32_0 : i32, i32
  }
  func.func @transform_2(%arg0: i32) -> (i32, i32) {
    %c0_i32 = arith.constant 0 : i32
    %c0_i32_0 = arith.constant 0 : i32
    %c0_i32_1 = arith.constant 0 : i32
    return %c0_i32, %c0_i32_0 : i32, i32
  }
  func.func @transform_3(%arg0: i32) -> (i32, i32) {
    %c0_i32 = arith.constant 0 : i32
    %c0_i32_0 = arith.constant 0 : i32
    %c0_i32_1 = arith.constant 0 : i32
    return %c0_i32, %c0_i32_0 : i32, i32
  }
  func.func @transform_4(%arg0: i32) -> (i32, i32) {
    %c0_i32 = arith.constant 0 : i32
    %c0_i32_0 = arith.constant 0 : i32
    %c0_i32_1 = arith.constant 0 : i32
    return %c0_i32, %c0_i32_0 : i32, i32
  }
  func.func @transform_5(%arg0: i32) -> (i32, i32) {
    %c0_i32 = arith.constant 0 : i32
    %c0_i32_0 = arith.constant 0 : i32
    %c0_i32_1 = arith.constant 0 : i32
    return %c0_i32, %c0_i32_0 : i32, i32
  }
  func.func @transform_6(%arg0: i32) -> (i32, i32) {
    %c0_i32 = arith.constant 0 : i32
    %c0_i32_0 = arith.constant 0 : i32
    %c0_i32_1 = arith.constant 0 : i32
    return %c0_i32, %c0_i32_0 : i32, i32
  }
  func.func @transform_7(%arg0: i32) -> (i32, i32) {
    %c0_i32 = arith.constant 0 : i32
    %c0_i32_0 = arith.constant 0 : i32
    %c0_i32_1 = arith.constant 0 : i32
    return %c0_i32, %c0_i32_0 : i32, i32
  }
  func.func @transform_8(%arg0: i32) -> (i32, i32) {
    %c0_i32 = arith.constant 0 : i32
    %c0_i32_0 = arith.constant 0 : i32
    %c0_i32_1 = arith.constant 0 : i32
    return %c0_i32, %c0_i32_0 : i32, i32
  }
  func.func @transform_9(%arg0: i32) -> (i32, i32) {
    %c0_i32 = arith.constant 0 : i32
    %c0_i32_0 = arith.constant 0 : i32
    return %arg0, %c0_i32 : i32, i32
  }
}

</mosaic_0001>

<llo_original>
// kernel: _sae_pallas.1
$region0: #{_sae_pallas.1}
  #allocation0 [shape = 'u32[]', space=smem, size = 0x4, offset = 0x4, fixed_abs, tag = 'smem constant byte address 0x4 - core index']
  #allocation1 [shape = 'u32[144,128]{1,0:T(1,128)}', space=vmem, size = 0x12000, scoped, tag = 'internal scratch']
  %s0 = inlined_call_operand.hbm [shape: bf16[64,256], index: 0, kind: input, shape index: {}]
  %s1 = inlined_call_operand.hbm [shape: bf16[256,128], index: 1, kind: input, shape index: {}]
  %s2 = inlined_call_operand.vmem [shape: f32[1,128], index: 2, kind: input, shape index: {}]
  %s3 = inlined_call_operand.hbm [shape: bf16[128,128], index: 3, kind: input, shape index: {}]
  %s4 = inlined_call_operand.vmem [shape: f32[1,128], index: 4, kind: input, shape index: {}]
  %s5 = inlined_call_operand.hbm [shape: bf16[128,128], index: 5, kind: input, shape index: {}]
  %s6 = inlined_call_operand.vmem [shape: f32[1,128], index: 6, kind: input, shape index: {}]
  %s7 = inlined_call_operand.hbm [shape: bf16[128,256], index: 7, kind: input, shape index: {}]
  %s8 = inlined_call_operand.vmem [shape: f32[1,256], index: 8, kind: input, shape index: {}]
  %s9 = inlined_call_operand.hbm [shape: f32[64,256], index: 9, kind: output, shape index: {}]
  %s10 = sld [smem:[#allocation0]]
  $region89: #{_sae_pallas.1} parent=0
    _
  %s12 = ssub.s32 1, %s10
  %s13 = scalar_select 0, %s12, %s10
  $region1: #{_sae_pallas.1} parent=0
    #allocation2 [shape = 'u8[32768]{0}', space=vmem, size = 0x8000, scoped, tag = 'input window, operand 0']
    #allocation3 [shape = 's32[2]{0}', space=sflag, size = 0x8, scoped, tag = 'scoped memory for _sae_pallas.1']
    #allocation4 [shape = 's32[2]{0}', space=sflag, size = 0x8, scoped, tag = 'scoped memory for _sae_pallas.1']
    #allocation5 [shape = 'u8[65536]{0}', space=vmem, size = 0x10000, scoped, tag = 'input window, operand 1, single buffered']
    #allocation6 [shape = 's32[1]{0}', space=sflag, size = 0x4, scoped, tag = 'scoped memory for _sae_pallas.1']
    #allocation7 [shape = 'u8[32768]{0}', space=vmem, size = 0x8000, scoped, tag = 'input window, operand 3, single buffered']
    #allocation8 [shape = 'u8[32768]{0}', space=vmem, size = 0x8000, scoped, tag = 'input window, operand 5, single buffered']
    #allocation9 [shape = 's32[1]{0}', space=sflag, size = 0x4, scoped, tag = 'scoped memory for _sae_pallas.1']
    #allocation10 [shape = 'u8[65536]{0}', space=vmem, size = 0x10000, scoped, tag = 'input window, operand 7, single buffered']
    #allocation11 [shape = 'u8[65536]{0}', space=vmem, size = 0x10000, scoped, tag = 'output window, operand 0']
    %14 = vsyncpa [#allocation3], 0
    %s15 = scalar_lea.sflag [#allocation3], 1
    %16 = vsyncpa %s15, 0
    %17 = vsyncpa [#allocation6], 0
    %18 = vsyncpa [#allocation9], 0
    %19 = vsyncpa [#allocation4], 0
    %s20 = scalar_lea.sflag [#allocation4], 1
    %21 = vsyncpa %s20, 0
    loop: start=0, step=1, limit=4
    $region2: #{_sae_pallas.1} parent=1 // loop_pre_header
      _
    $region3: #{_sae_pallas.1} parent=1 // loop_header
      %s23 = sphi 0, %s27
      %p24 = scmp.ge.s32.totalorder %s23, 4
      %s33 = sphi 0, %s35
      %s36 = sphi 0, %s33
      %s37 = sphi 0, %s36
      %s53 = sphi 0, %s37
      %s57 = sphi 0, %s57
      %s59 = sphi 0, %s57
      %s60 = sphi 0, %s59
      %s74 = sphi 0, %s60
      %s78 = sphi 0, %s78
      %s80 = sphi 0, %s78
      %s81 = sphi 0, %s80
      %s95 = sphi 0, %s81
      %s99 = sphi 0, %s99
      %s101 = sphi 0, %s99
      %s102 = sphi 0, %s101
      %s116 = sphi 0, %s102
      %s120 = sphi 0, %s120
      %s122 = sphi 0, %s120
      %s123 = sphi 0, %s122
      %s137 = sphi 0, %s123
      %s141 = sphi 0, %s141
      %s143 = sphi 0, %s141
      %s144 = sphi 0, %s143
      %s158 = sphi 0, %s144
      %s162 = sphi 0, %s162
      %s164 = sphi 0, %s162
      %s165 = sphi 0, %s164
      %s179 = sphi 0, %s165
      %s183 = sphi 0, %s183
      %s185 = sphi 0, %s183
      %s186 = sphi 0, %s185
      %s200 = sphi 0, %s186
      %s204 = sphi 0, %s204
      %s206 = sphi 0, %s204
      %s207 = sphi 0, %s206
      %s221 = sphi 0, %s207
      %s227 = sphi 0, %s229
      %s230 = sphi 0, %s227
      %s231 = sphi 0, %s230
      %s247 = sphi 0, %s231
    $region4: #{_sae_pallas.1} parent=1 // loop_header_branch
      %26 = sbr.rel (%p24) target = $region8
    $region5: #{_sae_pallas.1} parent=1 // loop_body
      %s28 = ssub.s32 %s23, 1
      %s29 = ssub.s32 %s23, 2
      %s30 = sadd.s32 %s23, 1
      %s31 = ssub.s32 %s23, %s30
      %p32 = scmp.eq.s32.totalorder %s31, 0
      %s34 = sadd.s32 %s33, 1
      %s35 = scalar_select %p32, %s33, %s34
      %p38 = pneg %p32
      %p39 = scmp.eq.s32.totalorder %s23, 1
      %p40 = por %p38, %p39
      %p41 = scmp.ne.s32.totalorder %s33, %s36
      %p42 = scmp.eq.s32.totalorder %s23, 0
      %p43 = por %p41, %p42
      %p44 = scmp.ne.s32.totalorder %s33, %s36
      %p45 = scmp.eq.s32.totalorder %s28, 1
      %p46 = por %p44, %p45
      %p47 = scmp.ne.s32.totalorder %s36, %s37
      %p48 = scmp.eq.s32.totalorder %s28, 0
      %p49 = por %p47, %p48
      %p50 = scmp.ne.s32.totalorder %s36, %s37
      %p51 = scmp.eq.s32.totalorder %s29, 1
      %p52 = por %p50, %p51
      %p54 = scmp.ne.s32.totalorder %s37, %s53
      %p55 = scmp.eq.s32.totalorder %s29, 0
      %p56 = por %p54, %p55
      %s58 = sadd.s32 %s57, 1
      %p61 = scmp.eq.s32.totalorder %s23, 1
      %p62 = scmp.ne.s32.totalorder %s57, %s59
      %p63 = scmp.eq.s32.totalorder %s23, 0
      %p64 = por %p62, %p63
      %p65 = scmp.ne.s32.totalorder %s57, %s59
      %p66 = scmp.eq.s32.totalorder %s28, 1
      %p67 = por %p65, %p66
      %p68 = scmp.ne.s32.totalorder %s59, %s60
      %p69 = scmp.eq.s32.totalorder %s28, 0
      %p70 = por %p68, %p69
      %p71 = scmp.ne.s32.totalorder %s59, %s60
      %p72 = scmp.eq.s32.totalorder %s29, 1
      %p73 = por %p71, %p72
      %p75 = scmp.ne.s32.totalorder %s60, %s74
      %p76 = scmp.eq.s32.totalorder %s29, 0
      %p77 = por %p75, %p76
      %s79 = sadd.s32 %s78, 1
      %p82 = scmp.eq.s32.totalorder %s23, 1
      %p83 = scmp.ne.s32.totalorder %s78, %s80
      %p84 = scmp.eq.s32.totalorder %s23, 0
      %p85 = por %p83, %p84
      %p86 = scmp.ne.s32.totalorder %s78, %s80
      %p87 = scmp.eq.s32.totalorder %s28, 1
      %p88 = por %p86, %p87
      %p89 = scmp.ne.s32.totalorder %s80, %s81
      %p90 = scmp.eq.s32.totalorder %s28, 0
      %p91 = por %p89, %p90
      %p92 = scmp.ne.s32.totalorder %s80, %s81
      %p93 = scmp.eq.s32.totalorder %s29, 1
      %p94 = por %p92, %p93
      %p96 = scmp.ne.s32.totalorder %s81, %s95
      %p97 = scmp.eq.s32.totalorder %s29, 0
      %p98 = por %p96, %p97
      %s100 = sadd.s32 %s99, 1
      %p103 = scmp.eq.s32.totalorder %s23, 1
      %p104 = scmp.ne.s32.totalorder %s99, %s101
      %p105 = scmp.eq.s32.totalorder %s23, 0
      %p106 = por %p104, %p105
      %p107 = scmp.ne.s32.totalorder %s99, %s101
      %p108 = scmp.eq.s32.totalorder %s28, 1
      %p109 = por %p107, %p108
      %p110 = scmp.ne.s32.totalorder %s101, %s102
      %p111 = scmp.eq.s32.totalorder %s28, 0
      %p112 = por %p110, %p111
      %p113 = scmp.ne.s32.totalorder %s101, %s102
      %p114 = scmp.eq.s32.totalorder %s29, 1
      %p115 = por %p113, %p114
      %p117 = scmp.ne.s32.totalorder %s102, %s116
      %p118 = scmp.eq.s32.totalorder %s29, 0
      %p119 = por %p117, %p118
      %s121 = sadd.s32 %s120, 1
      %p124 = scmp.eq.s32.totalorder %s23, 1
      %p125 = scmp.ne.s32.totalorder %s120, %s122
      %p126 = scmp.eq.s32.totalorder %s23, 0
      %p127 = por %p125, %p126
      %p128 = scmp.ne.s32.totalorder %s120, %s122
      %p129 = scmp.eq.s32.totalorder %s28, 1
      %p130 = por %p128, %p129
      %p131 = scmp.ne.s32.totalorder %s122, %s123
      %p132 = scmp.eq.s32.totalorder %s28, 0
      %p133 = por %p131, %p132
      %p134 = scmp.ne.s32.totalorder %s122, %s123
      %p135 = scmp.eq.s32.totalorder %s29, 1
      %p136 = por %p134, %p135
      %p138 = scmp.ne.s32.totalorder %s123, %s137
      %p139 = scmp.eq.s32.totalorder %s29, 0
      %p140 = por %p138, %p139
      %s142 = sadd.s32 %s141, 1
      %p145 = scmp.eq.s32.totalorder %s23, 1
      %p146 = scmp.ne.s32.totalorder %s141, %s143
      %p147 = scmp.eq.s32.totalorder %s23, 0
      %p148 = por %p146, %p147
      %p149 = scmp.ne.s32.totalorder %s141, %s143
      %p150 = scmp.eq.s32.totalorder %s28, 1
      %p151 = por %p149, %p150
      %p152 = scmp.ne.s32.totalorder %s143, %s144
      %p153 = scmp.eq.s32.totalorder %s28, 0
      %p154 = por %p152, %p153
      %p155 = scmp.ne.s32.totalorder %s143, %s144
      %p156 = scmp.eq.s32.totalorder %s29, 1
      %p157 = por %p155, %p156
      %p159 = scmp.ne.s32.totalorder %s144, %s158
      %p160 = scmp.eq.s32.totalorder %s29, 0
      %p161 = por %p159, %p160
      %s163 = sadd.s32 %s162, 1
      %p166 = scmp.eq.s32.totalorder %s23, 1
      %p167 = scmp.ne.s32.totalorder %s162, %s164
      %p168 = scmp.eq.s32.totalorder %s23, 0
      %p169 = por %p167, %p168
      %p170 = scmp.ne.s32.totalorder %s162, %s164
      %p171 = scmp.eq.s32.totalorder %s28, 1
      %p172 = por %p170, %p171
      %p173 = scmp.ne.s32.totalorder %s164, %s165
      %p174 = scmp.eq.s32.totalorder %s28, 0
      %p175 = por %p173, %p174
      %p176 = scmp.ne.s32.totalorder %s164, %s165
      %p177 = scmp.eq.s32.totalorder %s29, 1
      %p178 = por %p176, %p177
      %p180 = scmp.ne.s32.totalorder %s165, %s179
      %p181 = scmp.eq.s32.totalorder %s29, 0
      %p182 = por %p180, %p181
      %s184 = sadd.s32 %s183, 1
      %p187 = scmp.eq.s32.totalorder %s23, 1
      %p188 = scmp.ne.s32.totalorder %s183, %s185
      %p189 = scmp.eq.s32.totalorder %s23, 0
      %p190 = por %p188, %p189
      %p191 = scmp.ne.s32.totalorder %s183, %s185
      %p192 = scmp.eq.s32.totalorder %s28, 1
      %p193 = por %p191, %p192
      %p194 = scmp.ne.s32.totalorder %s185, %s186
      %p195 = scmp.eq.s32.totalorder %s28, 0
      %p196 = por %p194, %p195
      %p197 = scmp.ne.s32.totalorder %s185, %s186
      %p198 = scmp.eq.s32.totalorder %s29, 1
      %p199 = por %p197, %p198
      %p201 = scmp.ne.s32.totalorder %s186, %s200
      %p202 = scmp.eq.s32.totalorder %s29, 0
      %p203 = por %p201, %p202
      %s205 = sadd.s32 %s204, 1
      %p208 = scmp.eq.s32.totalorder %s23, 1
      %p209 = scmp.ne.s32.totalorder %s204, %s206
      %p210 = scmp.eq.s32.totalorder %s23, 0
      %p211 = por %p209, %p210
      %p212 = scmp.ne.s32.totalorder %s204, %s206
      %p213 = scmp.eq.s32.totalorder %s28, 1
      %p214 = por %p212, %p213
      %p215 = scmp.ne.s32.totalorder %s206, %s207
      %p216 = scmp.eq.s32.totalorder %s28, 0
      %p217 = por %p215, %p216
      %p218 = scmp.ne.s32.totalorder %s206, %s207
      %p219 = scmp.eq.s32.totalorder %s29, 1
      %p220 = por %p218, %p219
      %p222 = scmp.ne.s32.totalorder %s207, %s221
      %p223 = scmp.eq.s32.totalorder %s29, 0
      %p224 = por %p222, %p223
      %s225 = ssub.s32 %s23, %s30
      %p226 = scmp.eq.s32.totalorder %s225, 0
      %s228 = sadd.s32 %s227, 1
      %s229 = scalar_select %p226, %s227, %s228
      %p232 = pneg %p226
      %p233 = scmp.eq.s32.totalorder %s23, 1
      %p234 = por %p232, %p233
      %p235 = scmp.ne.s32.totalorder %s227, %s230
      %p236 = scmp.eq.s32.totalorder %s23, 0
      %p237 = por %p235, %p236
      %p238 = scmp.ne.s32.totalorder %s227, %s230
      %p239 = scmp.eq.s32.totalorder %s28, 1
      %p240 = por %p238, %p239
      %p241 = scmp.ne.s32.totalorder %s230, %s231
      %p242 = scmp.eq.s32.totalorder %s28, 0
      %p243 = por %p241, %p242
      %p244 = scmp.ne.s32.totalorder %s230, %s231
      %p245 = scmp.eq.s32.totalorder %s29, 1
      %p246 = por %p244, %p245
      %p248 = scmp.ne.s32.totalorder %s231, %s247
      %p249 = scmp.eq.s32.totalorder %s29, 0
      %p250 = por %p248, %p249
      %p251 = scmp.le.s32.totalorder 1, %s23
      %p252 = scmp.lt.s32.totalorder %s23, 3
      %p253 = pnand %p251, %p252
      %p254 = pneg %p253
      // Predicated region
      $region9: #{_sae_pallas.1} parent=5 // pred_check
        _
      $region10: #{_sae_pallas.1} parent=5 // pred_check_branch
        %256 = sbr.rel (%p253) target = $region12
      $region11: #{_sae_pallas.1} parent=5 // pred_region
        %s257 = ssub.s32 %s23, 1
        // Predicated region
        $region13: #{_sae_pallas.1} parent=11 // pred_check
          %p258 = pneg %p70
        $region14: #{_sae_pallas.1} parent=11 // pred_check_branch
          %260 = sbr.rel (%p258) target = $region16
        $region15: #{_sae_pallas.1} parent=11 // pred_region
          %s262 = ssub.s32 2048, 2048
          %263 = vsyncadd [#allocation6], %s262
          %s264 = sshll.u32 [#allocation5], 4
          %s265 = int_to_ptr.vmem [resolvable:$true] %s264
          %270 = dma.hbm_to_vmem [thread:$0]  %s1, 2048, %s265, [#allocation6], 64, 64, 4
        $region16: #{_sae_pallas.1} parent=11 // pred_fallthru
          _
        // Predicated region
        $region17: #{_sae_pallas.1} parent=11 // pred_check
          %p271 = pneg %p91
        $region18: #{_sae_pallas.1} parent=11 // pred_check_branch
          %273 = sbr.rel (%p271) target = $region20
        $region19: #{_sae_pallas.1} parent=11 // pred_region
          _
        $region20: #{_sae_pallas.1} parent=11 // pred_fallthru
          _
        // Predicated region
        $region21: #{_sae_pallas.1} parent=11 // pred_check
          %p274 = pneg %p112
        $region22: #{_sae_pallas.1} parent=11 // pred_check_branch
          %276 = sbr.rel (%p274) target = $region24
        $region23: #{_sae_pallas.1} parent=11 // pred_region
          %s278 = ssub.s32 1024, 1024
          %279 = vsyncadd [#allocation6], %s278
          %s280 = sshll.u32 [#allocation7], 4
          %s281 = int_to_ptr.vmem [resolvable:$true] %s280
          %286 = dma.hbm_to_vmem [thread:$0]  %s3, 1024, %s281, [#allocation6], 64, 64, 4
        $region24: #{_sae_pallas.1} parent=11 // pred_fallthru
          _
        // Predicated region
        $region25: #{_sae_pallas.1} parent=11 // pred_check
          %p287 = pneg %p133
        $region26: #{_sae_pallas.1} parent=11 // pred_check_branch
          %289 = sbr.rel (%p287) target = $region28
        $region27: #{_sae_pallas.1} parent=11 // pred_region
          _
        $region28: #{_sae_pallas.1} parent=11 // pred_fallthru
          _
        // Predicated region
        $region29: #{_sae_pallas.1} parent=11 // pred_check
          %p290 = pneg %p154
        $region30: #{_sae_pallas.1} parent=11 // pred_check_branch
          %292 = sbr.rel (%p290) target = $region32
        $region31: #{_sae_pallas.1} parent=11 // pred_region
          %s294 = ssub.s32 1024, 1024
          %295 = vsyncadd [#allocation9], %s294
          %s296 = sshll.u32 [#allocation8], 4
          %s297 = int_to_ptr.vmem [resolvable:$true] %s296
          %302 = dma.hbm_to_vmem [thread:$0]  %s5, 1024, %s297, [#allocation9], 64, 64, 4
        $region32: #{_sae_pallas.1} parent=11 // pred_fallthru
          _
        // Predicated region
        $region33: #{_sae_pallas.1} parent=11 // pred_check
          %p303 = pneg %p175
        $region34: #{_sae_pallas.1} parent=11 // pred_check_branch
          %305 = sbr.rel (%p303) target = $region36
        $region35: #{_sae_pallas.1} parent=11 // pred_region
          _
        $region36: #{_sae_pallas.1} parent=11 // pred_fallthru
          _
        // Predicated region
        $region37: #{_sae_pallas.1} parent=11 // pred_check
          %p306 = pneg %p196
        $region38: #{_sae_pallas.1} parent=11 // pred_check_branch
          %308 = sbr.rel (%p306) target = $region40
        $region39: #{_sae_pallas.1} parent=11 // pred_region
          %s310 = ssub.s32 2048, 2048
          %311 = vsyncadd [#allocation9], %s310
          %s312 = sshll.u32 [#allocation10], 4
          %s313 = int_to_ptr.vmem [resolvable:$true] %s312
          %318 = dma.hbm_to_vmem [thread:$0]  %s7, 2048, %s313, [#allocation9], 128, 128, 8
        $region40: #{_sae_pallas.1} parent=11 // pred_fallthru
          _
        // Predicated region
        $region41: #{_sae_pallas.1} parent=11 // pred_check
          %p319 = pneg %p217
        $region42: #{_sae_pallas.1} parent=11 // pred_check_branch
          %321 = sbr.rel (%p319) target = $region44
        $region43: #{_sae_pallas.1} parent=11 // pred_region
          _
        $region44: #{_sae_pallas.1} parent=11 // pred_fallthru
          _
      $region12: #{_sae_pallas.1} parent=5 // pred_fallthru
        _
      %p322 = scmp.lt.s32.totalorder %s23, 2
      // Predicated region
      $region45: #{_sae_pallas.1} parent=5 // pred_check
        %p323 = pneg %p322
      $region46: #{_sae_pallas.1} parent=5 // pred_check_branch
        %325 = sbr.rel (%p323) target = $region48
      $region47: #{_sae_pallas.1} parent=5 // pred_region
        // Predicated region
        $region49: #{_sae_pallas.1} parent=47 // pred_check
          %p326 = pneg %p43
        $region50: #{_sae_pallas.1} parent=47 // pred_check_branch
          %328 = sbr.rel (%p326) target = $region52
        $region51: #{_sae_pallas.1} parent=47 // pred_region
          %s329 = sand.u32 %s33, 1
          %s330 = scalar_lea.sflag [#allocation3], %s329
          %s331 = sand.u32 %s33, 1
          %s332 = smul.addr %s331, 32
          %s333 = scalar_lea.vmem [#allocation2], %s332
          %s334 = smul.u32 4, %s23
          %s336 = ssub.s32 512, 512
          %337 = vsyncadd %s330, %s336
          %s338 = smul.addr %s334, 2
          %s339 = smul.addr %s338, 64
          %s340 = scalar_lea.hbm %s0, %s339
          %s341 = sshll.u32 %s333, 4
          %s342 = int_to_ptr.vmem [resolvable:$true] %s341
          %347 = dma.hbm_to_vmem [thread:$0]  %s340, 512, %s342, %s330, 128, 128, 8
        $region52: #{_sae_pallas.1} parent=47 // pred_fallthru
          _
      $region48: #{_sae_pallas.1} parent=5 // pred_fallthru
        _
      %p348 = scmp.le.s32.totalorder 1, %s23
      %p349 = scmp.lt.s32.totalorder %s23, 3
      %p350 = pnand %p348, %p349
      %p351 = pneg %p350
      // Predicated region
      $region53: #{_sae_pallas.1} parent=5 // pred_check
        _
      $region54: #{_sae_pallas.1} parent=5 // pred_check_branch
        %353 = sbr.rel (%p350) target = $region56
      $region55: #{_sae_pallas.1} parent=5 // pred_region
        %s354 = ssub.s32 %s23, 1
        %s355 = sand.u32 %s36, 1
        %s356 = scalar_lea.sflag [#allocation3], %s355
        %s357 = sand.u32 %s36, 1
        %s358 = smul.addr %s357, 32
        %s359 = scalar_lea.vmem [#allocation2], %s358
        // Predicated region
        $region57: #{_sae_pallas.1} parent=55 // pred_check
          %p360 = pneg %p49
        $region58: #{_sae_pallas.1} parent=55 // pred_check_branch
          %362 = sbr.rel (%p360) target = $region60
        $region59: #{_sae_pallas.1} parent=55 // pred_region
          %363 = dma.done %s356, 512
        $region60: #{_sae_pallas.1} parent=55 // pred_fallthru
          _
        // Predicated region
        $region61: #{_sae_pallas.1} parent=55 // pred_check
          %p364 = pneg %p70
        $region62: #{_sae_pallas.1} parent=55 // pred_check_branch
          %366 = sbr.rel (%p364) target = $region64
        $region63: #{_sae_pallas.1} parent=55 // pred_region
          %367 = dma.done [#allocation6], 2048
        $region64: #{_sae_pallas.1} parent=55 // pred_fallthru
          _
        // Predicated region
        $region65: #{_sae_pallas.1} parent=55 // pred_check
          %p368 = pneg %p112
        $region66: #{_sae_pallas.1} parent=55 // pred_check_branch
          %370 = sbr.rel (%p368) target = $region68
        $region67: #{_sae_pallas.1} parent=55 // pred_region
          %371 = dma.done [#allocation6], 1024
        $region68: #{_sae_pallas.1} parent=55 // pred_fallthru
          _
        // Predicated region
        $region69: #{_sae_pallas.1} parent=55 // pred_check
          %p372 = pneg %p154
        $region70: #{_sae_pallas.1} parent=55 // pred_check_branch
          %374 = sbr.rel (%p372) target = $region72
        $region71: #{_sae_pallas.1} parent=55 // pred_region
          %375 = dma.done [#allocation9], 1024
        $region72: #{_sae_pallas.1} parent=55 // pred_fallthru
          _
        // Predicated region
        $region73: #{_sae_pallas.1} parent=55 // pred_check
          %p376 = pneg %p196
        $region74: #{_sae_pallas.1} parent=55 // pred_check_branch
          %378 = sbr.rel (%p376) target = $region76
        $region75: #{_sae_pallas.1} parent=55 // pred_region
          %379 = dma.done [#allocation9], 2048
        $region76: #{_sae_pallas.1} parent=55 // pred_fallthru
          _
        %s380 = sand.u32 %s36, 1
        %s381 = scalar_lea.sflag [#allocation3], %s380
        %s382 = sand.u32 %s36, 1
        %s383 = smul.addr %s382, 32
        %s384 = scalar_lea.vmem [#allocation2], %s383
        %p385 = pneg %p49
        %p386 = pneg %p46
        %p387 = pneg %p70
        %p388 = pneg %p67
        %p389 = pneg %p91
        %p390 = pneg %p88
        %p391 = pneg %p112
        %p392 = pneg %p109
        %p393 = pneg %p133
        %p394 = pneg %p130
        %p395 = pneg %p154
        %p396 = pneg %p151
        %p397 = pneg %p175
        %p398 = pneg %p172
        %p399 = pneg %p196
        %p400 = pneg %p193
        %p401 = pneg %p217
        %p402 = pneg %p214
        %p403 = pneg %p243
        %p404 = pneg %p240
        %s405 = sand.u32 %s230, 1
        %s406 = scalar_lea.sflag [#allocation4], %s405
        %s407 = sand.u32 %s230, 1
        %s408 = smul.addr %s407, 64
        %s409 = scalar_lea.vmem [#allocation11], %s408
        %s410 = smul.u32 4, %s28
        %s411 = smul.u32 4, %s28
        %v413 = vld [vmem:[%s359] sm:$0xff]
        %v414 = vld [vmem:[%s359 + $0x8] sm:$0xff]
        %v415 = vld [vmem:[%s359 + $0x10] sm:$0xff]
        %v416 = vld [vmem:[%s359 + $0x18] sm:$0xff]
        %v417 = vld [vmem:[#allocation5] sm:$0xf]
        %v418 = vld [vmem:[#allocation5 + $0x4] sm:$0xf]
        %v419 = vld [vmem:[#allocation5 + $0x8] sm:$0xf]
        %v420 = vld [vmem:[#allocation5 + $0xc] sm:$0xf]
        %v421 = vld [vmem:[#allocation5 + $0x10] sm:$0xf]
        %v422 = vld [vmem:[#allocation5 + $0x14] sm:$0xf]
        %v423 = vld [vmem:[#allocation5 + $0x18] sm:$0xf]
        %v424 = vld [vmem:[#allocation5 + $0x1c] sm:$0xf]
        %v425 = vld [vmem:[#allocation5 + $0x20] sm:$0xf]
        %v426 = vld [vmem:[#allocation5 + $0x24] sm:$0xf]
        %v427 = vld [vmem:[#allocation5 + $0x28] sm:$0xf]
        %v428 = vld [vmem:[#allocation5 + $0x2c] sm:$0xf]
        %v429 = vld [vmem:[#allocation5 + $0x30] sm:$0xf]
        %v430 = vld [vmem:[#allocation5 + $0x34] sm:$0xf]
        %v431 = vld [vmem:[#allocation5 + $0x38] sm:$0xf]
        %v432 = vld [vmem:[#allocation5 + $0x3c] sm:$0xf]
        %v433 = vld [vmem:[#allocation5 + $0x40] sm:$0xf]
        %v434 = vld [vmem:[#allocation5 + $0x44] sm:$0xf]
        %v435 = vld [vmem:[#allocation5 + $0x48] sm:$0xf]
        %v436 = vld [vmem:[#allocation5 + $0x4c] sm:$0xf]
        %v437 = vld [vmem:[#allocation5 + $0x50] sm:$0xf]
        %v438 = vld [vmem:[#allocation5 + $0x54] sm:$0xf]
        %v439 = vld [vmem:[#allocation5 + $0x58] sm:$0xf]
        %v440 = vld [vmem:[#allocation5 + $0x5c] sm:$0xf]
        %v441 = vld [vmem:[#allocation5 + $0x60] sm:$0xf]
        %v442 = vld [vmem:[#allocation5 + $0x64] sm:$0xf]
        %v443 = vld [vmem:[#allocation5 + $0x68] sm:$0xf]
        %v444 = vld [vmem:[#allocation5 + $0x6c] sm:$0xf]
        %v445 = vld [vmem:[#allocation5 + $0x70] sm:$0xf]
        %v446 = vld [vmem:[#allocation5 + $0x74] sm:$0xf]
        %v447 = vld [vmem:[#allocation5 + $0x78] sm:$0xf]
        %v448 = vld [vmem:[#allocation5 + $0x7c] sm:$0xf]
        %v449 = vld [vmem:[%s2] sm:$0x1]
        %v451 = vlaneseq
        %v452 = vshrl.u32 %v451, 7
        %v453 = vsub.s32 0, %v452
        %v454 = vrot.slane %v449, %v453
        %v460 = vunpack.c.l.b16 %v413
        %v461 = vunpack.c.h.b16 %v413
        %v462 = vunpack.c.l.b16 %v414
        %v463 = vunpack.c.h.b16 %v414
        %v464 = vunpack.c.l.b16 %v415
        %v465 = vunpack.c.h.b16 %v415
        %v466 = vunpack.c.l.b16 %v416
        %v467 = vunpack.c.h.b16 %v416
        %v468 = vpack.c.b16 %v462, %v460
        %v469 = vpack.c.b16 %v463, %v461
        %v470 = vpack.c.b16 %v466, %v464
        %v471 = vpack.c.b16 %v467, %v465
        %v508 = vunpack.c.l.b16 %v417
        %v509 = vunpack.c.l.b16 %v418
        %v510 = vunpack.c.l.b16 %v419
        %v511 = vunpack.c.l.b16 %v420
        %v512 = vunpack.c.l.b16 %v421
        %v513 = vunpack.c.l.b16 %v422
        %v514 = vunpack.c.l.b16 %v423
        %v515 = vunpack.c.l.b16 %v424
        %v516 = vunpack.c.l.b16 %v425
        %v517 = vunpack.c.l.b16 %v426
        %v518 = vunpack.c.l.b16 %v427
        %v519 = vunpack.c.l.b16 %v428
        %v520 = vunpack.c.l.b16 %v429
        %v521 = vunpack.c.l.b16 %v430
        %v522 = vunpack.c.l.b16 %v431
        %v523 = vunpack.c.l.b16 %v432
        %v524 = vunpack.c.l.b16 %v433
        %v525 = vunpack.c.l.b16 %v434
        %v526 = vunpack.c.l.b16 %v435
        %v527 = vunpack.c.l.b16 %v436
        %v528 = vunpack.c.l.b16 %v437
        %v529 = vunpack.c.l.b16 %v438
        %v530 = vunpack.c.l.b16 %v439
        %v531 = vunpack.c.l.b16 %v440
        %v532 = vunpack.c.l.b16 %v441
        %v533 = vunpack.c.l.b16 %v442
        %v534 = vunpack.c.l.b16 %v443
        %v535 = vunpack.c.l.b16 %v444
        %v536 = vunpack.c.l.b16 %v445
        %v537 = vunpack.c.l.b16 %v446
        %v538 = vunpack.c.l.b16 %v447
        %v539 = vunpack.c.l.b16 %v448
        %v540 = vpack.c.b16 %v509, %v508
        %v541 = vpack.c.b16 %v511, %v510
        %v542 = vpack.c.b16 %v513, %v512
        %v543 = vpack.c.b16 %v515, %v514
        %v544 = vpack.c.b16 %v517, %v516
        %v545 = vpack.c.b16 %v519, %v518
        %v546 = vpack.c.b16 %v521, %v520
        %v547 = vpack.c.b16 %v523, %v522
        %v548 = vpack.c.b16 %v525, %v524
        %v549 = vpack.c.b16 %v527, %v526
        %v550 = vpack.c.b16 %v529, %v528
        %v551 = vpack.c.b16 %v531, %v530
        %v552 = vpack.c.b16 %v533, %v532
        %v553 = vpack.c.b16 %v535, %v534
        %v554 = vpack.c.b16 %v537, %v536
        %v555 = vpack.c.b16 %v539, %v538
        %572 = vmatprep.subr.bf16.mxu0 0
        %573 = vmatpush1.bf16.msra.mxu0 %v547
        %574 = vmatprep.subr.bf16.mxu0 0
        %575 = vmatpush1.bf16.msra.mxu0 %v546
        %576 = vmatprep.subr.bf16.mxu0 0
        %577 = vmatpush1.bf16.msra.mxu0 %v545
        %578 = vmatprep.subr.bf16.mxu0 0
        %579 = vmatpush1.bf16.msra.mxu0 %v544
        %580 = vmatprep.subr.bf16.mxu0 0
        %581 = vmatpush1.bf16.msra.mxu0 %v543
        %582 = vmatprep.subr.bf16.mxu0 0
        %583 = vmatpush1.bf16.msra.mxu0 %v542
        %584 = vmatprep.subr.bf16.mxu0 0
        %585 = vmatpush1.bf16.msra.mxu0 %v541
        %586 = vmatprep.subr.bf16.mxu0 0
        %587 = vmatpush1.bf16.msra.mxu0 %v540
        %588 = vmatprep.subr.bf16.mxu0 0
        %589 = vmatpush2.bf16.msra.mxu0 %v555
        %590 = vmatprep.subr.bf16.mxu0 0
        %591 = vmatpush2.bf16.msra.mxu0 %v554
        %592 = vmatprep.subr.bf16.mxu0 0
        %593 = vmatpush2.bf16.msra.mxu0 %v553
        %594 = vmatprep.subr.bf16.mxu0 0
        %595 = vmatpush2.bf16.msra.mxu0 %v552
        %596 = vmatprep.subr.bf16.mxu0 0
        %597 = vmatpush2.bf16.msra.mxu0 %v551
        %598 = vmatprep.subr.bf16.mxu0 0
        %599 = vmatpush2.bf16.msra.mxu0 %v550
        %600 = vmatprep.subr.bf16.mxu0 0
        %601 = vmatpush2.bf16.msra.mxu0 %v549
        %602 = vmatprep.subr.bf16.mxu0 0
        %603 = vmatpush2.bf16.msra.mxu0 %v548
        %604 = vmatprep.mubr.bf16.mxu0 %v469
        %605 = vmatmul.mubr.bf16.gmra.mxu0 %v468
        %v606 = vpop.f32.mrf.mxu0
        %v607 = vadd.f32 %v454, %v606
        %v608 = vpop.f32.mrf.mxu0
        %v609 = vpop.f32.mrf.mxu0
        %v610 = vadd.f32 %v454, %v609
        %v611 = vpop.f32.mrf.mxu0
        %612 = vmatprep.mubr.bf16.mxu0 %v471
        %613 = vmatmul.mubr.bf16.gmra.mxu0 %v470
        %v614 = vpop.f32.mrf.mxu0
        %v615 = vadd.f32 %v454, %v614
        %v616 = vpop.f32.mrf.mxu0
        %v617 = vpop.f32.mrf.mxu0
        %v618 = vadd.f32 %v454, %v617
        %v619 = vpop.f32.mrf.mxu0
        %620 = vdwg.mxu0
        %v621 = vxor.u32 %v607, 2147483648
        %v622 = vxor.u32 %v610, 2147483648
        %v623 = vxor.u32 %v615, 2147483648
        %v624 = vxor.u32 %v618, 2147483648
        %v625 = vmul.f32 %v621, 1.442695
        %v626 = vpow.pop %v625
        %v627 = vmul.f32 %v622, 1.442695
        %v628 = vpow.pop %v627
        %v629 = vmul.f32 %v623, 1.442695
        %v630 = vpow.pop %v629
        %v631 = vmul.f32 %v624, 1.442695
        %v632 = vpow.pop %v631
        %v633 = vadd.f32 %v626, 1.0
        %v634 = vadd.f32 %v628, 1.0
        %v635 = vadd.f32 %v630, 1.0
        %v636 = vadd.f32 %v632, 1.0
        %v637 = vrcp.pop %v633
        %v638 = vmul.f32 1.0, %v637
        %v639 = vrcp.pop %v634
        %v640 = vmul.f32 1.0, %v639
        %v641 = vrcp.pop %v635
        %v642 = vmul.f32 1.0, %v641
        %v643 = vrcp.pop %v636
        %v644 = vmul.f32 1.0, %v643
        %v645 = vpack.c.bf16 %v640, %v638
        %v646 = vpack.c.bf16 %v644, %v642
        %v647 = vld [vmem:[#allocation7] sm:$0xf]
        %v648 = vld [vmem:[#allocation7 + $0x4] sm:$0xf]
        %v649 = vld [vmem:[#allocation7 + $0x8] sm:$0xf]
        %v650 = vld [vmem:[#allocation7 + $0xc] sm:$0xf]
        %v651 = vld [vmem:[#allocation7 + $0x10] sm:$0xf]
        %v652 = vld [vmem:[#allocation7 + $0x14] sm:$0xf]
        %v653 = vld [vmem:[#allocation7 + $0x18] sm:$0xf]
        %v654 = vld [vmem:[#allocation7 + $0x1c] sm:$0xf]
        %v655 = vld [vmem:[#allocation7 + $0x20] sm:$0xf]
        %v656 = vld [vmem:[#allocation7 + $0x24] sm:$0xf]
        %v657 = vld [vmem:[#allocation7 + $0x28] sm:$0xf]
        %v658 = vld [vmem:[#allocation7 + $0x2c] sm:$0xf]
        %v659 = vld [vmem:[#allocation7 + $0x30] sm:$0xf]
        %v660 = vld [vmem:[#allocation7 + $0x34] sm:$0xf]
        %v661 = vld [vmem:[#allocation7 + $0x38] sm:$0xf]
        %v662 = vld [vmem:[#allocation7 + $0x3c] sm:$0xf]
        %v663 = vld [vmem:[%s4] sm:$0x1]
        %v665 = vlaneseq
        %v666 = vshrl.u32 %v665, 7
        %v667 = vsub.s32 0, %v666
        %v668 = vrot.slane %v663, %v667
        %v686 = vunpack.c.l.b16 %v647
        %v687 = vunpack.c.l.b16 %v648
        %v688 = vunpack.c.l.b16 %v649
        %v689 = vunpack.c.l.b16 %v650
        %v690 = vunpack.c.l.b16 %v651
        %v691 = vunpack.c.l.b16 %v652
        %v692 = vunpack.c.l.b16 %v653
        %v693 = vunpack.c.l.b16 %v654
        %v694 = vunpack.c.l.b16 %v655
        %v695 = vunpack.c.l.b16 %v656
        %v696 = vunpack.c.l.b16 %v657
        %v697 = vunpack.c.l.b16 %v658
        %v698 = vunpack.c.l.b16 %v659
        %v699 = vunpack.c.l.b16 %v660
        %v700 = vunpack.c.l.b16 %v661
        %v701 = vunpack.c.l.b16 %v662
        %v702 = vpack.c.b16 %v687, %v686
        %v703 = vpack.c.b16 %v689, %v688
        %v704 = vpack.c.b16 %v691, %v690
        %v705 = vpack.c.b16 %v693, %v692
        %v706 = vpack.c.b16 %v695, %v694
        %v707 = vpack.c.b16 %v697, %v696
        %v708 = vpack.c.b16 %v699, %v698
        %v709 = vpack.c.b16 %v701, %v700
        %718 = vmatprep.subr.bf16.mxu0 0
        %719 = vmatpush1.bf16.msra.mxu0 %v709
        %720 = vmatprep.subr.bf16.mxu0 0
        %721 = vmatpush1.bf16.msra.mxu0 %v708
        %722 = vmatprep.subr.bf16.mxu0 0
        %723 = vmatpush1.bf16.msra.mxu0 %v707
        %724 = vmatprep.subr.bf16.mxu0 0
        %725 = vmatpush1.bf16.msra.mxu0 %v706
        %726 = vmatprep.subr.bf16.mxu0 0
        %727 = vmatpush1.bf16.msra.mxu0 %v705
        %728 = vmatprep.subr.bf16.mxu0 0
        %729 = vmatpush1.bf16.msra.mxu0 %v704
        %730 = vmatprep.subr.bf16.mxu0 0
        %731 = vmatpush1.bf16.msra.mxu0 %v703
        %732 = vmatprep.subr.bf16.mxu0 0
        %733 = vmatpush1.bf16.msra.mxu0 %v702
        %734 = vmatprep.subr.bf16.mxu0 0
        %735 = vmatpush2.bf16.msra.mxu0 0
        %736 = vmatprep.subr.bf16.mxu0 0
        %737 = vmatpush2.bf16.msra.mxu0 0
        %738 = vmatprep.subr.bf16.mxu0 0
        %739 = vmatpush2.bf16.msra.mxu0 0
        %740 = vmatprep.subr.bf16.mxu0 0
        %741 = vmatpush2.bf16.msra.mxu0 0
        %742 = vmatprep.subr.bf16.mxu0 0
        %743 = vmatpush2.bf16.msra.mxu0 0
        %744 = vmatprep.subr.bf16.mxu0 0
        %745 = vmatpush2.bf16.msra.mxu0 0
        %746 = vmatprep.subr.bf16.mxu0 0
        %747 = vmatpush2.bf16.msra.mxu0 0
        %748 = vmatprep.subr.bf16.mxu0 0
        %749 = vmatpush2.bf16.msra.mxu0 0
        %750 = vmatprep.mubr.bf16.mxu0 0
        %751 = vmatmul.mubr.bf16.gmra.mxu0 %v645
        %v752 = vpop.f32.mrf.mxu0
        %v753 = vadd.f32 %v668, %v752
        %v754 = vpop.f32.mrf.mxu0
        %v755 = vpop.f32.mrf.mxu0
        %v756 = vadd.f32 %v668, %v755
        %v757 = vpop.f32.mrf.mxu0
        %758 = vmatprep.mubr.bf16.mxu0 0
        %759 = vmatmul.mubr.bf16.gmra.mxu0 %v646
        %v760 = vpop.f32.mrf.mxu0
        %v761 = vadd.f32 %v668, %v760
        %v762 = vpop.f32.mrf.mxu0
        %v763 = vpop.f32.mrf.mxu0
        %v764 = vadd.f32 %v668, %v763
        %v765 = vpop.f32.mrf.mxu0
        %766 = vdwg.mxu0
        %v767 = vxor.u32 %v753, 2147483648
        %v768 = vxor.u32 %v756, 2147483648
        %v769 = vxor.u32 %v761, 2147483648
        %v770 = vxor.u32 %v764, 2147483648
        %v771 = vmul.f32 %v767, 1.442695
        %v772 = vpow.pop %v771
        %v773 = vmul.f32 %v768, 1.442695
        %v774 = vpow.pop %v773
        %v775 = vmul.f32 %v769, 1.442695
        %v776 = vpow.pop %v775
        %v777 = vmul.f32 %v770, 1.442695
        %v778 = vpow.pop %v777
        %v779 = vadd.f32 %v772, 1.0
        %v780 = vadd.f32 %v774, 1.0
        %v781 = vadd.f32 %v776, 1.0
        %v782 = vadd.f32 %v778, 1.0
        %v783 = vrcp.pop %v779
        %v784 = vmul.f32 1.0, %v783
        %v785 = vrcp.pop %v780
        %v786 = vmul.f32 1.0, %v785
        %v787 = vrcp.pop %v781
        %v788 = vmul.f32 1.0, %v787
        %v789 = vrcp.pop %v782
        %v790 = vmul.f32 1.0, %v789
        %v791 = vpack.c.bf16 %v786, %v784
        %v792 = vpack.c.bf16 %v790, %v788
        %v793 = vld [vmem:[#allocation8] sm:$0xf]
        %v794 = vld [vmem:[#allocation8 + $0x4] sm:$0xf]
        %v795 = vld [vmem:[#allocation8 + $0x8] sm:$0xf]
        %v796 = vld [vmem:[#allocation8 + $0xc] sm:$0xf]
        %v797 = vld [vmem:[#allocation8 + $0x10] sm:$0xf]
        %v798 = vld [vmem:[#allocation8 + $0x14] sm:$0xf]
        %v799 = vld [vmem:[#allocation8 + $0x18] sm:$0xf]
        %v800 = vld [vmem:[#allocation8 + $0x1c] sm:$0xf]
        %v801 = vld [vmem:[#allocation8 + $0x20] sm:$0xf]
        %v802 = vld [vmem:[#allocation8 + $0x24] sm:$0xf]
        %v803 = vld [vmem:[#allocation8 + $0x28] sm:$0xf]
        %v804 = vld [vmem:[#allocation8 + $0x2c] sm:$0xf]
        %v805 = vld [vmem:[#allocation8 + $0x30] sm:$0xf]
        %v806 = vld [vmem:[#allocation8 + $0x34] sm:$0xf]
        %v807 = vld [vmem:[#allocation8 + $0x38] sm:$0xf]
        %v808 = vld [vmem:[#allocation8 + $0x3c] sm:$0xf]
        %v809 = vld [vmem:[%s6] sm:$0x1]
        %v811 = vlaneseq
        %v812 = vshrl.u32 %v811, 7
        %v813 = vsub.s32 0, %v812
        %v814 = vrot.slane %v809, %v813
        %v832 = vunpack.c.l.b16 %v793
        %v833 = vunpack.c.l.b16 %v794
        %v834 = vunpack.c.l.b16 %v795
        %v835 = vunpack.c.l.b16 %v796
        %v836 = vunpack.c.l.b16 %v797
        %v837 = vunpack.c.l.b16 %v798
        %v838 = vunpack.c.l.b16 %v799
        %v839 = vunpack.c.l.b16 %v800
        %v840 = vunpack.c.l.b16 %v801
        %v841 = vunpack.c.l.b16 %v802
        %v842 = vunpack.c.l.b16 %v803
        %v843 = vunpack.c.l.b16 %v804
        %v844 = vunpack.c.l.b16 %v805
        %v845 = vunpack.c.l.b16 %v806
        %v846 = vunpack.c.l.b16 %v807
        %v847 = vunpack.c.l.b16 %v808
        %v848 = vpack.c.b16 %v833, %v832
        %v849 = vpack.c.b16 %v835, %v834
        %v850 = vpack.c.b16 %v837, %v836
        %v851 = vpack.c.b16 %v839, %v838
        %v852 = vpack.c.b16 %v841, %v840
        %v853 = vpack.c.b16 %v843, %v842
        %v854 = vpack.c.b16 %v845, %v844
        %v855 = vpack.c.b16 %v847, %v846
        %864 = vmatprep.subr.bf16.mxu0 0
        %865 = vmatpush1.bf16.msra.mxu0 %v855
        %866 = vmatprep.subr.bf16.mxu0 0
        %867 = vmatpush1.bf16.msra.mxu0 %v854
        %868 = vmatprep.subr.bf16.mxu0 0
        %869 = vmatpush1.bf16.msra.mxu0 %v853
        %870 = vmatprep.subr.bf16.mxu0 0
        %871 = vmatpush1.bf16.msra.mxu0 %v852
        %872 = vmatprep.subr.bf16.mxu0 0
        %873 = vmatpush1.bf16.msra.mxu0 %v851
        %874 = vmatprep.subr.bf16.mxu0 0
        %875 = vmatpush1.bf16.msra.mxu0 %v850
        %876 = vmatprep.subr.bf16.mxu0 0
        %877 = vmatpush1.bf16.msra.mxu0 %v849
        %878 = vmatprep.subr.bf16.mxu0 0
        %879 = vmatpush1.bf16.msra.mxu0 %v848
        %880 = vmatprep.subr.bf16.mxu0 0
        %881 = vmatpush2.bf16.msra.mxu0 0
        %882 = vmatprep.subr.bf16.mxu0 0
        %883 = vmatpush2.bf16.msra.mxu0 0
        %884 = vmatprep.subr.bf16.mxu0 0
        %885 = vmatpush2.bf16.msra.mxu0 0
        %886 = vmatprep.subr.bf16.mxu0 0
        %887 = vmatpush2.bf16.msra.mxu0 0
        %888 = vmatprep.subr.bf16.mxu0 0
        %889 = vmatpush2.bf16.msra.mxu0 0
        %890 = vmatprep.subr.bf16.mxu0 0
        %891 = vmatpush2.bf16.msra.mxu0 0
        %892 = vmatprep.subr.bf16.mxu0 0
        %893 = vmatpush2.bf16.msra.mxu0 0
        %894 = vmatprep.subr.bf16.mxu0 0
        %895 = vmatpush2.bf16.msra.mxu0 0
        %896 = vmatprep.mubr.bf16.mxu0 0
        %897 = vmatmul.mubr.bf16.gmra.mxu0 %v791
        %v898 = vpop.f32.mrf.mxu0
        %v899 = vadd.f32 %v814, %v898
        %v900 = vpop.f32.mrf.mxu0
        %v901 = vpop.f32.mrf.mxu0
        %v902 = vadd.f32 %v814, %v901
        %v903 = vpop.f32.mrf.mxu0
        %904 = vmatprep.mubr.bf16.mxu0 0
        %905 = vmatmul.mubr.bf16.gmra.mxu0 %v792
        %v906 = vpop.f32.mrf.mxu0
        %v907 = vadd.f32 %v814, %v906
        %v908 = vpop.f32.mrf.mxu0
        %v909 = vpop.f32.mrf.mxu0
        %v910 = vadd.f32 %v814, %v909
        %v911 = vpop.f32.mrf.mxu0
        %912 = vdwg.mxu0
        %v913 = vxor.u32 %v899, 2147483648
        %v914 = vxor.u32 %v902, 2147483648
        %v915 = vxor.u32 %v907, 2147483648
        %v916 = vxor.u32 %v910, 2147483648
        %v917 = vmul.f32 %v913, 1.442695
        %v918 = vpow.pop %v917
        %v919 = vmul.f32 %v914, 1.442695
        %v920 = vpow.pop %v919
        %v921 = vmul.f32 %v915, 1.442695
        %v922 = vpow.pop %v921
        %v923 = vmul.f32 %v916, 1.442695
        %v924 = vpow.pop %v923
        %v925 = vadd.f32 %v918, 1.0
        %v926 = vadd.f32 %v920, 1.0
        %v927 = vadd.f32 %v922, 1.0
        %v928 = vadd.f32 %v924, 1.0
        %v929 = vrcp.pop %v925
        %v930 = vmul.f32 1.0, %v929
        %v931 = vrcp.pop %v926
        %v932 = vmul.f32 1.0, %v931
        %v933 = vrcp.pop %v927
        %v934 = vmul.f32 1.0, %v933
        %v935 = vrcp.pop %v928
        %v936 = vmul.f32 1.0, %v935
        %v937 = vpack.c.bf16 %v932, %v930
        %v938 = vpack.c.bf16 %v936, %v934
        %v939 = vld [vmem:[#allocation10] sm:$0xff]
        %v940 = vld [vmem:[#allocation10 + $0x8] sm:$0xff]
        %v941 = vld [vmem:[#allocation10 + $0x10] sm:$0xff]
        %v942 = vld [vmem:[#allocation10 + $0x18] sm:$0xff]
        %v943 = vld [vmem:[#allocation10 + $0x20] sm:$0xff]
        %v944 = vld [vmem:[#allocation10 + $0x28] sm:$0xff]
        %v945 = vld [vmem:[#allocation10 + $0x30] sm:$0xff]
        %v946 = vld [vmem:[#allocation10 + $0x38] sm:$0xff]
        %v947 = vld [vmem:[#allocation10 + $0x40] sm:$0xff]
        %v948 = vld [vmem:[#allocation10 + $0x48] sm:$0xff]
        %v949 = vld [vmem:[#allocation10 + $0x50] sm:$0xff]
        %v950 = vld [vmem:[#allocation10 + $0x58] sm:$0xff]
        %v951 = vld [vmem:[#allocation10 + $0x60] sm:$0xff]
        %v952 = vld [vmem:[#allocation10 + $0x68] sm:$0xff]
        %v953 = vld [vmem:[#allocation10 + $0x70] sm:$0xff]
        %v954 = vld [vmem:[#allocation10 + $0x78] sm:$0xff]
        %v955 = vld [vmem:[%s8] sm:$0x3]
        %v957 = vlaneseq
        %v958 = vshrl.u32 %v957, 7
        %v959 = vsub.s32 0, %v958
        %v960 = vrot.slane %v955, %v959
        %v961 = vlaneseq
        %v962 = vshrl.u32 %v961, 7
        %v963 = vsub.s32 1, %v962
        %v964 = vrot.slane %v955, %v963
        %v983 = vunpack.c.l.b16 %v939
        %v984 = vunpack.c.h.b16 %v939
        %v985 = vunpack.c.l.b16 %v940
        %v986 = vunpack.c.h.b16 %v940
        %v987 = vunpack.c.l.b16 %v941
        %v988 = vunpack.c.h.b16 %v941
        %v989 = vunpack.c.l.b16 %v942
        %v990 = vunpack.c.h.b16 %v942
        %v991 = vunpack.c.l.b16 %v943
        %v992 = vunpack.c.h.b16 %v943
        %v993 = vunpack.c.l.b16 %v944
        %v994 = vunpack.c.h.b16 %v944
        %v995 = vunpack.c.l.b16 %v945
        %v996 = vunpack.c.h.b16 %v945
        %v997 = vunpack.c.l.b16 %v946
        %v998 = vunpack.c.h.b16 %v946
        %v999 = vunpack.c.l.b16 %v947
        %v1000 = vunpack.c.h.b16 %v947
        %v1001 = vunpack.c.l.b16 %v948
        %v1002 = vunpack.c.h.b16 %v948
        %v1003 = vunpack.c.l.b16 %v949
        %v1004 = vunpack.c.h.b16 %v949
        %v1005 = vunpack.c.l.b16 %v950
        %v1006 = vunpack.c.h.b16 %v950
        %v1007 = vunpack.c.l.b16 %v951
        %v1008 = vunpack.c.h.b16 %v951
        %v1009 = vunpack.c.l.b16 %v952
        %v1010 = vunpack.c.h.b16 %v952
        %v1011 = vunpack.c.l.b16 %v953
        %v1012 = vunpack.c.h.b16 %v953
        %v1013 = vunpack.c.l.b16 %v954
        %v1014 = vunpack.c.h.b16 %v954
        %v1015 = vpack.c.b16 %v985, %v983
        %v1016 = vpack.c.b16 %v986, %v984
        %v1017 = vpack.c.b16 %v989, %v987
        %v1018 = vpack.c.b16 %v990, %v988
        %v1019 = vpack.c.b16 %v993, %v991
        %v1020 = vpack.c.b16 %v994, %v992
        %v1021 = vpack.c.b16 %v997, %v995
        %v1022 = vpack.c.b16 %v998, %v996
        %v1023 = vpack.c.b16 %v1001, %v999
        %v1024 = vpack.c.b16 %v1002, %v1000
        %v1025 = vpack.c.b16 %v1005, %v1003
        %v1026 = vpack.c.b16 %v1006, %v1004
        %v1027 = vpack.c.b16 %v1009, %v1007
        %v1028 = vpack.c.b16 %v1010, %v1008
        %v1029 = vpack.c.b16 %v1013, %v1011
        %v1030 = vpack.c.b16 %v1014, %v1012
        %1047 = vmatprep.subr.bf16.mxu0 %v1030
        %1048 = vmatpush1.bf16.msra.mxu0 %v1029
        %1049 = vmatprep.subr.bf16.mxu0 %v1028
        %1050 = vmatpush1.bf16.msra.mxu0 %v1027
        %1051 = vmatprep.subr.bf16.mxu0 %v1026
        %1052 = vmatpush1.bf16.msra.mxu0 %v1025
        %1053 = vmatprep.subr.bf16.mxu0 %v1024
        %1054 = vmatpush1.bf16.msra.mxu0 %v1023
        %1055 = vmatprep.subr.bf16.mxu0 %v1022
        %1056 = vmatpush1.bf16.msra.mxu0 %v1021
        %1057 = vmatprep.subr.bf16.mxu0 %v1020
        %1058 = vmatpush1.bf16.msra.mxu0 %v1019
        %1059 = vmatprep.subr.bf16.mxu0 %v1018
        %1060 = vmatpush1.bf16.msra.mxu0 %v1017
        %1061 = vmatprep.subr.bf16.mxu0 %v1016
        %1062 = vmatpush1.bf16.msra.mxu0 %v1015
        %1063 = vmatprep.subr.bf16.mxu0 0
        %1064 = vmatpush2.bf16.msra.mxu0 0
        %1065 = vmatprep.subr.bf16.mxu0 0
        %1066 = vmatpush2.bf16.msra.mxu0 0
        %1067 = vmatprep.subr.bf16.mxu0 0
        %1068 = vmatpush2.bf16.msra.mxu0 0
        %1069 = vmatprep.subr.bf16.mxu0 0
        %1070 = vmatpush2.bf16.msra.mxu0 0
        %1071 = vmatprep.subr.bf16.mxu0 0
        %1072 = vmatpush2.bf16.msra.mxu0 0
        %1073 = vmatprep.subr.bf16.mxu0 0
        %1074 = vmatpush2.bf16.msra.mxu0 0
        %1075 = vmatprep.subr.bf16.mxu0 0
        %1076 = vmatpush2.bf16.msra.mxu0 0
        %1077 = vmatprep.subr.bf16.mxu0 0
        %1078 = vmatpush2.bf16.msra.mxu0 0
        %1079 = vmatprep.mubr.bf16.mxu0 0
        %1080 = vmatmul.mubr.bf16.gmra.mxu0 %v937
        %v1081 = vpop.f32.mrf.mxu0
        %v1082 = vadd.f32 %v960, %v1081
        %v1083 = vpop.f32.mrf.mxu0
        %v1084 = vadd.f32 %v964, %v1083
        %v1085 = vpop.f32.mrf.mxu0
        %v1086 = vadd.f32 %v960, %v1085
        %v1087 = vpop.f32.mrf.mxu0
        %v1088 = vadd.f32 %v964, %v1087
        %1089 = vmatprep.mubr.bf16.mxu0 0
        %1090 = vmatmul.mubr.bf16.gmra.mxu0 %v938
        %v1091 = vpop.f32.mrf.mxu0
        %v1092 = vadd.f32 %v960, %v1091
        %v1093 = vpop.f32.mrf.mxu0
        %v1094 = vadd.f32 %v964, %v1093
        %v1095 = vpop.f32.mrf.mxu0
        %v1096 = vadd.f32 %v960, %v1095
        %v1097 = vpop.f32.mrf.mxu0
        %v1098 = vadd.f32 %v964, %v1097
        %1099 = vdwg.mxu0
        %1100 = vst [vmem:[%s409] sm:$0xff] %v1082
        %1101 = vst [vmem:[%s409 + $0x8] sm:$0xff] %v1084
        %1102 = vst [vmem:[%s409 + $0x10] sm:$0xff] %v1086
        %1103 = vst [vmem:[%s409 + $0x18] sm:$0xff] %v1088
        %1104 = vst [vmem:[%s409 + $0x20] sm:$0xff] %v1092
        %1105 = vst [vmem:[%s409 + $0x28] sm:$0xff] %v1094
        %1106 = vst [vmem:[%s409 + $0x30] sm:$0xff] %v1096
        %1107 = vst [vmem:[%s409 + $0x38] sm:$0xff] %v1098
        %s1108 = sand.u32 %s230, 1
        %s1109 = scalar_lea.sflag [#allocation4], %s1108
        %s1110 = sand.u32 %s230, 1
        %s1111 = smul.addr %s1110, 64
        %s1112 = scalar_lea.vmem [#allocation11], %s1111
        // Predicated region
        $region77: #{_sae_pallas.1} parent=55 // pred_check
          %p1113 = pneg %p240
        $region78: #{_sae_pallas.1} parent=55 // pred_check_branch
          %1115 = sbr.rel (%p1113) target = $region80
        $region79: #{_sae_pallas.1} parent=55 // pred_region
          %s1116 = smul.u32 4, %s28
          %s1118 = ssub.s32 1024, 1024
          %1119 = vsyncadd %s1109, %s1118
          %s1120 = smul.addr %s1116, 2
          %s1121 = smul.addr %s1120, 128
          %s1122 = scalar_lea.hbm %s9, %s1121
          %s1123 = sshll.u32 %s1112, 4
          %s1124 = int_to_ptr.vmem [resolvable:$true] %s1123
          %1129 = dma.vmem_to_hbm [thread:$0]  %s1124, 1024, %s1122, %s1109, 256, 256, 16
        $region80: #{_sae_pallas.1} parent=55 // pred_fallthru
          _
      $region56: #{_sae_pallas.1} parent=5 // pred_fallthru
        _
      %p1130 = scmp.le.s32.totalorder 2, %s23
      // Predicated region
      $region81: #{_sae_pallas.1} parent=5 // pred_check
        %p1131 = pneg %p1130
      $region82: #{_sae_pallas.1} parent=5 // pred_check_branch
        %1133 = sbr.rel (%p1131) target = $region84
      $region83: #{_sae_pallas.1} parent=5 // pred_region
        %s1134 = ssub.s32 %s23, 2
        // Predicated region
        $region85: #{_sae_pallas.1} parent=83 // pred_check
          %p1135 = pneg %p246
        $region86: #{_sae_pallas.1} parent=83 // pred_check_branch
          %1137 = sbr.rel (%p1135) target = $region88
        $region87: #{_sae_pallas.1} parent=83 // pred_region
          %s1138 = sand.u32 %s231, 1
          %s1139 = scalar_lea.sflag [#allocation4], %s1138
          %s1140 = sand.u32 %s231, 1
          %s1141 = smul.addr %s1140, 64
          %s1142 = scalar_lea.vmem [#allocation11], %s1141
          %1143 = dma.done %s1139, 1024
        $region88: #{_sae_pallas.1} parent=83 // pred_fallthru
          _
      $region84: #{_sae_pallas.1} parent=5 // pred_fallthru
        _
    $region6: #{_sae_pallas.1} parent=1 // loop_footer
      %s27 = sadd.s32 1, %s23
    $region7: #{_sae_pallas.1} parent=1 // loop_footer_branch
      %22 = sbr.rel target = $region3
    $region8: #{_sae_pallas.1} parent=1 // loop_exit
      _
    %1144 = vsyncpa [#allocation3], 1
    %s1145 = scalar_lea.sflag [#allocation3], 1
    %1146 = vsyncpa %s1145, 1
    %1147 = vsyncpa [#allocation6], 1
    %1148 = vsyncpa [#allocation9], 1
    %1149 = vsyncpa [#allocation4], 1
    %s1150 = scalar_lea.sflag [#allocation4], 1
    %1151 = vsyncpa %s1150, 1

</llo_original>
